<compile_context>
chip_gen: v6e
topology: v6e:2x2x1
jax: 0.10.0
libtpu: 0.0.40
codegen_flags: <defaults>
</compile_context>

<pallas_src>
import jax
import jax.numpy as jnp
import numpy as np
from jax.experimental import pallas as pl
from jax.experimental.pallas import tpu as pltpu

_EPS = 1e-5

# ConvTranspose2d(k=4, s=2, p=1): output row 2*p + ry reads input rows p + oy - 1 for
# window offsets oy in {0, 1, 2}; each offset -> (parity, kernel index):
#   oy=0 -> (ry=0, ky=3);  oy=1 -> (ry=0, ky=1), (ry=1, ky=2);  oy=2 -> (ry=1, ky=0).
# The identical table applies to columns (ox -> (rx, kx)).
_TAPS = {0: ((0, 3),), 1: ((0, 1), (1, 2)), 2: ((1, 0),)}


def _pack_row_weight(w_pt, c1, c2, W, dtype):
    """ConvTranspose2d weight [Cin, Cout, 4, 4] -> row-im2col weight [3, W*Cin, 4*W*Cout].

    Row axis mirrors the padded-scratch lane layout: the first W*c1 rows are (w, c) of the
    first concat operand, the next W*c2 rows are (w, c) of the second operand (global
    channel c1 + c).  Column axis is (ry, q, rx, co) so the matmul result is already in
    the flat (h, ry, w, rx, c) order of the upsampled [2H, 2W, Cout] output.
    """
    w_np = np.asarray(w_pt, np.float32)
    cin, cout = w_np.shape[0], w_np.shape[1]
    assert c1 + c2 == cin
    ncol = 4 * W * cout
    out = np.zeros((3, W * cin, ncol), np.float32)
    streams = ((0, 0, c1), (W * c1, c1, c2))        # (row_base, global_ch0, width)
    for oy, ytaps in _TAPS.items():
        for ry, ky in ytaps:
            for ox, xtaps in _TAPS.items():
                for rx, kx in xtaps:
                    blk = w_np[:, :, ky, kx]        # [Cin, Cout]
                    for q in range(W):
                        iw = q + ox - 1             # contributing input column
                        if not 0 <= iw < W:
                            continue                # zero-pad contribution
                        col0 = ((ry * W + q) * 2 + rx) * cout
                        for row_base, ch0, cs in streams:
                            r0 = row_base + iw * cs
                            out[oy, r0:r0 + cs, col0:col0 + cout] = blk[ch0:ch0 + cs, :]
    return jnp.asarray(out, dtype)


def _conv_rows(x1_ref, x2_ref, w_ref, xp_ref):
    """Fused ReLU + channel-concat + row-padded im2col + 3 accumulating MXU matmuls.

    x1_ref: [TB, H, W*c1], x2_ref: [TB, H, W*c2]   (lane order (w, c), f32)
    w_ref:  [3, W*Cin, NCOL] packed weight (compute dtype)
    xp_ref: [TB, H+2, W*Cin] scratch (compute dtype); rows 0 and H+1 are the zero pad.
    Returns acc [TB*H, NCOL] in f32.
    """
    TB, H, wc1 = x1_ref.shape
    wc2 = x2_ref.shape[2]
    k = wc1 + wc2
    ncol = w_ref.shape[2]
    cdt = xp_ref.dtype

    # Zero only the two padding rows; the interior is fully overwritten below.
    zrow = jnp.zeros((TB, 1, k), cdt)
    xp_ref[:, 0:1, :] = zrow
    xp_ref[:, H + 1:H + 2, :] = zrow
    # ReLU + channel concat: the two operands land in adjacent lane ranges of the scratch.
    xp_ref[:, 1:H + 1, :wc1] = jnp.maximum(x1_ref[...], 0.0).astype(cdt)
    xp_ref[:, 1:H + 1, wc1:] = jnp.maximum(x2_ref[...], 0.0).astype(cdt)

    acc = jnp.zeros((TB * H, ncol), jnp.float32)
    for oy in range(3):                             # static 3-tap loop over padded rows
        lhs = xp_ref[:, oy:oy + H, :].reshape(TB * H, k)
        acc += jnp.dot(lhs, w_ref[oy], preferred_element_type=jnp.float32)
    return acc


def _conv_bn_stats_kernel(x1_ref, x2_ref, w_ref, y_ref, stats_ref, xp_ref):
    """ReLU+concat+ConvT (no bias) -> lane-dense y + per-tile centered BN partials."""
    acc = _conv_rows(x1_ref, x2_ref, w_ref, xp_ref)
    tb, h, ncol = y_ref.shape
    y_ref[...] = acc.reshape(tb, h, ncol).astype(y_ref.dtype)
    # Per-lane sum and CENTERED second moment (combined Chan-style in the finalize,
    # avoiding the E[x^2] - mean^2 cancellation).  Stats stay in f32.
    s = jnp.sum(acc, axis=0, keepdims=True)                          # [1, NCOL]
    m2 = jnp.sum((acc - s / acc.shape[0]) ** 2, axis=0, keepdims=True)
    stats_ref[0] = jnp.concatenate([s, m2], axis=0)                  # [2, NCOL]


def _conv_bias_tanh_kernel(x1_ref, x2_ref, w_ref, b_ref, o_ref, xp_ref):
    """Last decoder layer: ReLU+concat+ConvT+bias -> tanh, lane-dense single pass."""
    acc = _conv_rows(x1_ref, x2_ref, w_ref, xp_ref) + b_ref[...]
    tb, h, ncol = o_ref.shape
    o_ref[...] = jnp.tanh(acc).reshape(tb, h, ncol).astype(o_ref.dtype)


def _bn_apply_kernel(y_ref, scale_ref, shift_ref, o_ref):
    """Apply precomputed BatchNorm scale/shift (everything already lane-dense)."""
    y = y_ref[...].astype(jnp.float32)
    o_ref[...] = (y * scale_ref[...] + shift_ref[...]).astype(o_ref.dtype)


class DecoderLayerPallas:
    """JAX/Pallas port of model/decoder.py::DecoderLayer (norm_layer=nn.BatchNorm2d)."""

    def __init__(self, inner_nc, outer_nc, idx_layer, num_layers, use_dropout=False,
                 compute_dtype=jnp.bfloat16, key=jax.random.PRNGKey(0)):
        self.idx_layer = idx_layer
        self.num_layers = num_layers
        self.inner_nc = inner_nc
        self.outer_nc = outer_nc
        self.use_dropout = use_dropout
        self.compute_dtype = compute_dtype

        kw, kb = jax.random.split(key)
        bound = 1.0 / np.sqrt(inner_nc * 4 * 4)            # PyTorch default init bound
        self.weight = jax.random.uniform(kw, (inner_nc, outer_nc, 4, 4),
                                         jnp.float32, -bound, bound)
        # With BatchNorm2d, use_bias=False for every layer except the last one.
        self.has_bias = (idx_layer == num_layers - 1)
        if self.has_bias:
            self.bias = jax.random.uniform(kb, (outer_nc,), jnp.float32, -bound, bound)
        else:
            self.bias = jnp.zeros((outer_nc,), jnp.float32)
        self.gamma = jnp.ones((outer_nc,), jnp.float32)    # BatchNorm weight init
        self.beta = jnp.zeros((outer_nc,), jnp.float32)    # BatchNorm bias init
        self._wr_cache = {}                                # row weight depends on (W, c1)

    def _row_weight(self, W, c1, c2):
        key = (W, c1)
        if key not in self._wr_cache:
            self._wr_cache[key] = _pack_row_weight(self.weight, c1, c2, W,
                                                   self.compute_dtype)
        return self._wr_cache[key]

    def _pick_batch_tile(self, B, H, W, ncol):
        """Largest batch tile (divisor of B) whose working set fits ~40 MiB of VMEM."""
        cs = jnp.dtype(self.compute_dtype).itemsize
        cin = self.inner_nc
        w_bytes = 2 * 3 * W * cin * ncol * cs              # double-buffered weight block
        per_b = (2 * H * W * cin * 4                       # double-buffered f32 inputs
                 + (H + 2) * W * cin * cs                  # padded scratch
                 + H * ncol * (4 + 2 * (cs + 4)))          # acc + double-buffered y/out
        budget = 40 * 1024 * 1024
        tb = 1
        for d in range(1, B + 1):
            if B % d == 0 and w_bytes + d * per_b <= budget:
                tb = d
        return tb

    def __call__(self, enc_output, dec_output=None, cate=None):
        # Channel concat (PyTorch dim=1 == NHWC last axis) happens inside the kernel;
        # here we only pick the two operands.
        if self.idx_layer == 0:
            B = cate.shape[0]
            x1 = cate.reshape(B, 1, 1, cate.shape[1])
            x2 = enc_output
        else:
            x1, x2 = enc_output, dec_output

        B, H, W, c1 = x1.shape
        c2 = x2.shape[-1]
        assert c1 + c2 == self.inner_nc and x2.shape[:3] == (B, H, W)
        cin, cout = self.inner_nc, self.outer_nc
        ncol = 4 * W * cout                                # output columns: (ry, w, rx, c)
        cdt = self.compute_dtype

        wr = self._row_weight(W, c1, c2)                   # [3, W*Cin, NCOL]
        # Fold W into the lane axis (pure metadata reshape of the NHWC input).
        x1l = x1.reshape(B, H, W * c1)
        x2l = x2.reshape(B, H, W * c2)

        TB = self._pick_batch_tile(B, H, W, ncol)
        nb = B // TB

        cparams = pltpu.CompilerParams(
            dimension_semantics=("parallel",),             # batch tiles -> both TCs on v7x
            vmem_limit_bytes=48 * 1024 * 1024)             # headroom below v7x's 64 MiB

        in_specs = [
            pl.BlockSpec((TB, H, W * c1), lambda b: (b, 0, 0)),
            pl.BlockSpec((TB, H, W * c2), lambda b: (b, 0, 0)),
            # Grid-invariant weight: constant index_map, fetched once across the grid.
            pl.BlockSpec((3, W * cin, ncol), lambda b: (0, 0, 0)),
        ]
        scratch = [pltpu.VMEM((TB, H + 2, W * cin), cdt)]
        act_spec = pl.BlockSpec((TB, H, ncol), lambda b: (b, 0, 0))

        if self.idx_layer == self.num_layers - 1:
            # Last layer: ConvT + bias -> tanh, written lane-dense in one pass.
            bias_l = jnp.tile(self.bias, 4 * W).reshape(1, ncol)
            out = pl.pallas_call(
                _conv_bias_tanh_kernel,
                grid=(nb,),
                in_specs=in_specs + [pl.BlockSpec((1, ncol), lambda b: (0, 0))],
                out_specs=act_spec,
                out_shape=jax.ShapeDtypeStruct((B, H, ncol), jnp.float32),
                scratch_shapes=scratch,
                compiler_params=cparams,
            )(x1l, x2l, wr, bias_l)
        else:
            # Pass 1: conv + per-tile BN partials; y kept in compute dtype (bf16 default)
            # to halve the inter-pass HBM round trip.
            y, stats = pl.pallas_call(
                _conv_bn_stats_kernel,
                grid=(nb,),
                in_specs=in_specs,
                out_specs=(act_spec,
                           pl.BlockSpec((1, 2, ncol), lambda b: (b, 0, 0))),
                out_shape=(jax.ShapeDtypeStruct((B, H, ncol), cdt),
                           jax.ShapeDtypeStruct((nb, 2, ncol), jnp.float32)),
                scratch_shapes=scratch,
                compiler_params=cparams,
            )(x1l, x2l, wr)

            # BatchNorm2d train-mode statistics: Chan-style combine of the per-tile
            # (sum, centered M2) partials -- tiny [Cout]-sized XLA ops.
            nc = TB * H                                    # rows per (tile, lane) chunk
            n_tot = nb * 4 * W * nc                        # elements per channel
            s = stats[:, 0, :].reshape(nb, 4 * W, cout)
            m2 = stats[:, 1, :].reshape(nb, 4 * W, cout)
            mean = jnp.sum(s, axis=(0, 1)) / n_tot
            var = (jnp.sum(m2, axis=(0, 1))
                   + nc * jnp.sum((s / nc - mean) ** 2, axis=(0, 1))) / n_tot
            scale = self.gamma * jax.lax.rsqrt(var + _EPS)
            shift = self.beta - mean * scale
            scale_l = jnp.tile(scale, 4 * W).reshape(1, ncol)
            shift_l = jnp.tile(shift, 4 * W).reshape(1, ncol)

            # Pass 2: lane-dense normalize.
            out = pl.pallas_call(
                _bn_apply_kernel,
                grid=(nb,),
                in_specs=[act_spec,
                          pl.BlockSpec((1, ncol), lambda b: (0, 0)),
                          pl.BlockSpec((1, ncol), lambda b: (0, 0))],
                out_specs=act_spec,
                out_shape=jax.ShapeDtypeStruct((B, H, ncol), jnp.float32),
                compiler_params=cparams,
            )(y, scale_l, shift_l)

        # Pure metadata reshape: (b, h, ry, w, rx, c) -> [B, 2H, 2W, Cout].
        return out.reshape(B, 2 * H, 2 * W, cout)


def _reference(layer, enc, dec=None, cate=None):
    """Pure-JAX reference (scatter formulation of ConvTranspose2d), f32 throughout."""
    if layer.idx_layer == 0:
        B = cate.shape[0]
        x = jnp.concatenate([cate.reshape(B, 1, 1, -1), enc], axis=-1)
    else:
        x = jnp.concatenate([enc, dec], axis=-1)
    x = jnp.maximum(x, 0.0)
    B, H, W, _ = x.shape
    Cout = layer.outer_nc
    out_pad = jnp.zeros((B, 2 * H + 2, 2 * W + 2, Cout), jnp.float32)
    for ky in range(4):
        for kx in range(4):
            contrib = jnp.einsum('bhwi,io->bhwo', x, layer.weight[:, :, ky, kx])
            out_pad = out_pad.at[:, ky:ky + 2 * H:2, kx:kx + 2 * W:2, :].add(contrib)
    out = out_pad[:, 1:2 * H + 1, 1:2 * W + 1, :] + layer.bias
    if layer.idx_layer == layer.num_layers - 1:
        return jnp.tanh(out)
    mean = out.mean(axis=(0, 1, 2), keepdims=True)
    var = ((out - mean) ** 2).mean(axis=(0, 1, 2), keepdims=True)
    return (out - mean) * jax.lax.rsqrt(var + _EPS) * layer.gamma + layer.beta


if __name__ == "__main__":
    key = jax.random.PRNGKey(0)
    ks = jax.random.split(key, 8)

    enc1 = jax.random.normal(ks[0], (2, 8, 8, 8), jnp.float32)
    dec1 = jax.random.normal(ks[1], (2, 8, 8, 8), jnp.float32)

    # (1) Middle decoder layer (idx 1 of 3): ReLU(concat)->ConvT(4,2,1)->BatchNorm,
    #     f32 compute path: tight tolerance validates the row-weight packing exactly.
    mid32 = DecoderLayerPallas(16, 8, idx_layer=1, num_layers=3, key=ks[2],
                               compute_dtype=jnp.float32)
    out = jax.block_until_ready(mid32(enc1, dec1))
    assert out.shape == (2, 16, 16, 8)
    np.testing.assert_allclose(np.asarray(out), np.asarray(_reference(mid32, enc1, dec1)),
                               rtol=5e-4, atol=5e-4)

    # (2) Same layer, default bf16 MXU operands + bf16 y intermediate (looser tolerance;
    #     precise validation is the f32 path above).
    mid16 = DecoderLayerPallas(16, 8, idx_layer=1, num_layers=3, key=ks[2])
    out = jax.block_until_ready(mid16(enc1, dec1))
    np.testing.assert_allclose(np.asarray(out), np.asarray(_reference(mid16, enc1, dec1)),
                               rtol=1e-1, atol=1e-1)

    # (3) Last decoder layer (idx 2 of 3): ReLU(concat)->ConvT+bias->Tanh (bf16 default).
    enc2 = jax.random.normal(ks[3], (2, 8, 8, 8), jnp.float32)
    dec2 = jax.random.normal(ks[4], (2, 8, 8, 8), jnp.float32)
    last = DecoderLayerPallas(16, 4, idx_layer=2, num_layers=3, key=ks[5])
    out = jax.block_until_ready(last(enc2, dec2))
    assert out.shape == (2, 16, 16, 4)
    np.testing.assert_allclose(np.asarray(out), np.asarray(_reference(last, enc2, dec2)),
                               rtol=1e-1, atol=1e-1)

    # (4) First decoder layer (idx 0): concat([cate, enc], C) at 1x1 spatial, f32 path.
    enc3 = jax.random.normal(ks[6], (2, 1, 1, 8), jnp.float32)
    cate = jax.random.normal(ks[7], (2, 8), jnp.float32)
    first = DecoderLayerPallas(16, 8, idx_layer=0, num_layers=3, key=ks[2],
                               compute_dtype=jnp.float32)
    out = jax.block_until_ready(first(enc3, cate=cate))
    assert out.shape == (2, 2, 2, 8)
    np.testing.assert_allclose(np.asarray(out),
                               np.asarray(_reference(first, enc3, cate=cate)),
                               rtol=5e-4, atol=5e-4)

    print("KERNEL_OK")
</pallas_src>

<mosaic_0001>
module attributes {stable_mosaic.version = 11 : i64} {
  func.func @_conv_bn_stats_kernel(%arg0: i32, %arg1: memref<2x8x64xf32, #tpu.memory_space<vmem>>, %arg2: memref<2x8x64xf32, #tpu.memory_space<vmem>>, %arg3: memref<3x128x256xf32, #tpu.memory_space<vmem>>, %arg4: memref<2x8x256xf32, #tpu.memory_space<vmem>>, %arg5: memref<1x2x256xf32, #tpu.memory_space<vmem>>, %arg6: memref<2x10x128xf32, #tpu.memory_space<vmem>>) attributes {dimension_semantics = [#tpu.dimension_semantics<parallel>], iteration_bounds = array<i64: 1>, scalar_prefetch = 0 : i64, scratch_operands = 1 : i64, tpu.core_type = #tpu.core_type<tc>, window_params = [{transform_indices = @transform_0, window_bounds = array<i64: 2, 8, 64>}, {transform_indices = @transform_1, window_bounds = array<i64: 2, 8, 64>}, {pipeline_mode = #tpu.pipeline_mode<synchronous>, transform_indices = @transform_2, window_bounds = array<i64: 3, 128, 256>}, {transform_indices = @transform_3, window_bounds = array<i64: 2, 8, 256>}, {transform_indices = @transform_4, window_bounds = array<i64: 1, 2, 256>}]} {
    %cst = arith.constant 0.000000e+00 : f32
    %0 = vector.broadcast %cst : f32 to vector<2x1x128xf32>
    %c0 = arith.constant 0 : index
    %c0_0 = arith.constant 0 : index
    %c0_1 = arith.constant 0 : index
    %1 = vector.load %arg6[%c0, %c0_0, %c0_1] : memref<2x10x128xf32, #tpu.memory_space<vmem>>, vector<2x1x128xf32>
    tpu.vector_store %arg6[%c0, %c0_0, %c0_1], %0 {strides = array<i32>} : memref<2x10x128xf32, #tpu.memory_space<vmem>>, vector<2x1x128xf32>,
    %c0_2 = arith.constant 0 : index
    %c9 = arith.constant 9 : index
    %c0_3 = arith.constant 0 : index
    %2 = vector.load %arg6[%c0_2, %c9, %c0_3] : memref<2x10x128xf32, #tpu.memory_space<vmem>>, vector<2x1x128xf32>
    tpu.vector_store %arg6[%c0_2, %c9, %c0_3], %0 {strides = array<i32>} : memref<2x10x128xf32, #tpu.memory_space<vmem>>, vector<2x1x128xf32>,
    %c0_4 = arith.constant 0 : index
    %c0_5 = arith.constant 0 : index
    %c0_6 = arith.constant 0 : index
    %3 = vector.load %arg1[%c0_4, %c0_5, %c0_6] : memref<2x8x64xf32, #tpu.memory_space<vmem>>, vector<2x8x64xf32>
    %cst_7 = arith.constant 0.000000e+00 : f32
    %4 = vector.broadcast %cst_7 : f32 to vector<2x8x64xf32>
    %5 = arith.maximumf %3, %4 : vector<2x8x64xf32>
    %c0_8 = arith.constant 0 : index
    %c1 = arith.constant 1 : index
    %c0_9 = arith.constant 0 : index
    %6 = vector.load %arg6[%c0_8, %c1, %c0_9] : memref<2x10x128xf32, #tpu.memory_space<vmem>>, vector<2x8x64xf32>
    tpu.vector_store %arg6[%c0_8, %c1, %c0_9], %5 {strides = array<i32>} : memref<2x10x128xf32, #tpu.memory_space<vmem>>, vector<2x8x64xf32>,
    %c0_10 = arith.constant 0 : index
    %c0_11 = arith.constant 0 : index
    %c0_12 = arith.constant 0 : index
    %7 = vector.load %arg2[%c0_10, %c0_11, %c0_12] : memref<2x8x64xf32, #tpu.memory_space<vmem>>, vector<2x8x64xf32>
    %cst_13 = arith.constant 0.000000e+00 : f32
    %8 = vector.broadcast %cst_13 : f32 to vector<2x8x64xf32>
    %9 = arith.maximumf %7, %8 : vector<2x8x64xf32>
    %c0_14 = arith.constant 0 : index
    %c1_15 = arith.constant 1 : index
    %c64 = arith.constant 64 : index
    %10 = vector.load %arg6[%c0_14, %c1_15, %c64] : memref<2x10x128xf32, #tpu.memory_space<vmem>>, vector<2x8x64xf32>
    tpu.vector_store %arg6[%c0_14, %c1_15, %c64], %9 {strides = array<i32>} : memref<2x10x128xf32, #tpu.memory_space<vmem>>, vector<2x8x64xf32>,
    %cst_16 = arith.constant 0.000000e+00 : f32
    %11 = vector.broadcast %cst_16 : f32 to vector<16x256xf32>
    %c0_17 = arith.constant 0 : index
    %c0_18 = arith.constant 0 : index
    %c0_19 = arith.constant 0 : index
    %12 = vector.load %arg6[%c0_17, %c0_18, %c0_19] : memref<2x10x128xf32, #tpu.memory_space<vmem>>, vector<2x8x128xf32>
    %13 = vector.shape_cast %12 : vector<2x8x128xf32> to vector<16x128xf32>
    %c0_20 = arith.constant 0 : index
    %c0_21 = arith.constant 0 : index
    %c0_22 = arith.constant 0 : index
    %14 = vector.load %arg3[%c0_20, %c0_21, %c0_22] : memref<3x128x256xf32, #tpu.memory_space<vmem>>, vector<1x128x256xf32>
    %15 = vector.shape_cast %14 : vector<1x128x256xf32> to vector<128x256xf32>
    %cst_23 = arith.constant dense<0.000000e+00> : vector<16x256xf32>
    %16 = tpu.matmul %13, %15, %cst_23 {dimension_numbers = #tpu.dot_dimension_numbers<[1], [0], [0], [1], [0, 0, 1, 1], [], []>} : vector<16x128xf32>, vector<128x256xf32>, vector<16x256xf32> -> vector<16x256xf32>
    %17 = arith.addf %11, %16 : vector<16x256xf32>
    %c0_24 = arith.constant 0 : index
    %c1_25 = arith.constant 1 : index
    %c0_26 = arith.constant 0 : index
    %18 = vector.load %arg6[%c0_24, %c1_25, %c0_26] : memref<2x10x128xf32, #tpu.memory_space<vmem>>, vector<2x8x128xf32>
    %19 = vector.shape_cast %18 : vector<2x8x128xf32> to vector<16x128xf32>
    %c1_27 = arith.constant 1 : index
    %c0_28 = arith.constant 0 : index
    %c0_29 = arith.constant 0 : index
    %20 = vector.load %arg3[%c1_27, %c0_28, %c0_29] : memref<3x128x256xf32, #tpu.memory_space<vmem>>, vector<1x128x256xf32>
    %21 = vector.shape_cast %20 : vector<1x128x256xf32> to vector<128x256xf32>
    %cst_30 = arith.constant dense<0.000000e+00> : vector<16x256xf32>
    %22 = tpu.matmul %19, %21, %cst_30 {dimension_numbers = #tpu.dot_dimension_numbers<[1], [0], [0], [1], [0, 0, 1, 1], [], []>} : vector<16x128xf32>, vector<128x256xf32>, vector<16x256xf32> -> vector<16x256xf32>
    %23 = arith.addf %17, %22 : vector<16x256xf32>
    %c0_31 = arith.constant 0 : index
    %c2 = arith.constant 2 : index
    %c0_32 = arith.constant 0 : index
    %24 = vector.load %arg6[%c0_31, %c2, %c0_32] : memref<2x10x128xf32, #tpu.memory_space<vmem>>, vector<2x8x128xf32>
    %25 = vector.shape_cast %24 : vector<2x8x128xf32> to vector<16x128xf32>
    %c2_33 = arith.constant 2 : index
    %c0_34 = arith.constant 0 : index
    %c0_35 = arith.constant 0 : index
    %26 = vector.load %arg3[%c2_33, %c0_34, %c0_35] : memref<3x128x256xf32, #tpu.memory_space<vmem>>, vector<1x128x256xf32>
    %27 = vector.shape_cast %26 : vector<1x128x256xf32> to vector<128x256xf32>
    %cst_36 = arith.constant dense<0.000000e+00> : vector<16x256xf32>
    %28 = tpu.matmul %25, %27, %cst_36 {dimension_numbers = #tpu.dot_dimension_numbers<[1], [0], [0], [1], [0, 0, 1, 1], [], []>} : vector<16x128xf32>, vector<128x256xf32>, vector<16x256xf32> -> vector<16x256xf32>
    %29 = arith.addf %23, %28 : vector<16x256xf32>
    %30 = vector.shape_cast %29 : vector<16x256xf32> to vector<2x8x256xf32>
    %c0_37 = arith.constant 0 : index
    %c0_38 = arith.constant 0 : index
    %c0_39 = arith.constant 0 : index
    %31 = vector.load %arg4[%c0_37, %c0_38, %c0_39] : memref<2x8x256xf32, #tpu.memory_space<vmem>>, vector<2x8x256xf32>
    tpu.vector_store %arg4[%c0_37, %c0_38, %c0_39], %30 {strides = array<i32>} : memref<2x8x256xf32, #tpu.memory_space<vmem>>, vector<2x8x256xf32>,
    %cst_40 = arith.constant dense<0.000000e+00> : vector<256xf32>
    %32 = vector.multi_reduction <add>, %29, %cst_40 [0] : vector<16x256xf32> to vector<256xf32>
    %33 = vector.shape_cast %32 : vector<256xf32> to vector<1x256xf32>
    %cst_41 = arith.constant 1.600000e+01 : f32
    %34 = vector.broadcast %cst_41 : f32 to vector<1x256xf32>
    %35 = arith.divf %33, %34 : vector<1x256xf32>
    %36 = vector.broadcast %35 : vector<1x256xf32> to vector<16x256xf32>
    %37 = arith.subf %29, %36 : vector<16x256xf32>
    %38 = arith.mulf %37, %37 : vector<16x256xf32>
    %cst_42 = arith.constant dense<0.000000e+00> : vector<256xf32>
    %39 = vector.multi_reduction <add>, %38, %cst_42 [0] : vector<16x256xf32> to vector<256xf32>
    %40 = vector.shape_cast %39 : vector<256xf32> to vector<1x256xf32>
    %41 = tpu.concatenate %33, %40 in 0 : vector<1x256xf32>, vector<1x256xf32> -> vector<2x256xf32>
    %c0_43 = arith.constant 0 : index
    %c0_44 = arith.constant 0 : index
    %c0_45 = arith.constant 0 : index
    %42 = vector.load %arg5[%c0_43, %c0_44, %c0_45] : memref<1x2x256xf32, #tpu.memory_space<vmem>>, vector<1x2x256xf32>
    %43 = vector.shape_cast %42 : vector<1x2x256xf32> to vector<2x256xf32>
    %44 = vector.shape_cast %41 : vector<2x256xf32> to vector<1x2x256xf32>
    tpu.vector_store %arg5[%c0_43, %c0_44, %c0_45], %44 {strides = array<i32>} : memref<1x2x256xf32, #tpu.memory_space<vmem>>, vector<1x2x256xf32>,
    return
  }
  func.func @transform_0(%arg0: i32) -> (i32, i32, i32) {
    %c0_i32 = arith.constant 0 : i32
    %c0_i32_0 = arith.constant 0 : i32
    %c0_i32_1 = arith.constant 0 : i32
    return %arg0, %c0_i32, %c0_i32_0 : i32, i32, i32
  }
  func.func @transform_1(%arg0: i32) -> (i32, i32, i32) {
    %c0_i32 = arith.constant 0 : i32
    %c0_i32_0 = arith.constant 0 : i32
    %c0_i32_1 = arith.constant 0 : i32
    return %arg0, %c0_i32, %c0_i32_0 : i32, i32, i32
  }
  func.func @transform_2(%arg0: i32) -> (i32, i32, i32) {
    %c0_i32 = arith.constant 0 : i32
    %c0_i32_0 = arith.constant 0 : i32
    %c0_i32_1 = arith.constant 0 : i32
    %c0_i32_2 = arith.constant 0 : i32
    return %c0_i32, %c0_i32_0, %c0_i32_1 : i32, i32, i32
  }
  func.func @transform_3(%arg0: i32) -> (i32, i32, i32) {
    %c0_i32 = arith.constant 0 : i32
    %c0_i32_0 = arith.constant 0 : i32
    %c0_i32_1 = arith.constant 0 : i32
    return %arg0, %c0_i32, %c0_i32_0 : i32, i32, i32
  }
  func.func @transform_4(%arg0: i32) -> (i32, i32, i32) {
    %c0_i32 = arith.constant 0 : i32
    %c0_i32_0 = arith.constant 0 : i32
    %c0_i32_1 = arith.constant 0 : i32
    return %arg0, %c0_i32, %c0_i32_0 : i32, i32, i32
  }
}

</mosaic_0001>

<llo_original>
// kernel: tpu_custom_call.1
$region0: #{tpu_custom_call.1}
  #allocation0 [shape = 'u32[]', space=smem, size = 0x4, offset = 0x4, fixed_abs, tag = 'smem constant byte address 0x4 - core index']
  #allocation1 [shape = 'u32[144,128]{1,0:T(1,128)}', space=vmem, size = 0x12000, scoped, tag = 'internal scratch']
  #allocation2 [shape = 'f32[2,10,128]{2,1,0:T(8,128)}', space=vmem, size = 0x4000, scoped, tag = 'scratch operand']
  %s0 = inlined_call_operand.hbm [shape: f32[2,8,64], index: 0, kind: input, shape index: {}]
  %s1 = inlined_call_operand.hbm [shape: f32[2,8,64], index: 1, kind: input, shape index: {}]
  %s2 = inlined_call_operand.hbm [shape: f32[3,128,256], index: 2, kind: input, shape index: {}]
  %s3 = inlined_call_operand.hbm [shape: f32[2,8,256], index: 3, kind: output, shape index: {0}]
  %s4 = inlined_call_operand.hbm [shape: f32[1,2,256], index: 4, kind: output, shape index: {1}]
  %5 = xla_tuple %s3, %s4
  %s6 = sld [smem:[#allocation0]]
  $region42: #{tpu_custom_call.1} parent=0
    _
  %s8 = ssub.s32 1, %s6
  %s9 = scalar_select 0, %s8, %s6
  $region1: #{tpu_custom_call.1} parent=0
    #allocation3 [shape = 'u8[8192]{0}', space=vmem, size = 0x2000, scoped, tag = 'input window, operand 0, single buffered']
    #allocation4 [shape = 's32[1]{0}', space=sflag, size = 0x4, scoped, tag = 'scoped memory for tpu_custom_call.1']
    #allocation5 [shape = 's32[1]{0}', space=sflag, size = 0x4, scoped, tag = 'scoped memory for tpu_custom_call.1']
    #allocation6 [shape = 'u8[8192]{0}', space=vmem, size = 0x2000, scoped, tag = 'input window, operand 1, single buffered']
    #allocation7 [shape = 's32[1]{0}', space=sflag, size = 0x4, scoped, tag = 'scoped memory for tpu_custom_call.1']
    #allocation8 [shape = 'u8[393216]{0}', space=vmem, size = 0x60000, scoped, tag = 'input window, operand 2, single buffered']
    #allocation9 [shape = 'u8[16384]{0}', space=vmem, size = 0x4000, scoped, tag = 'output window, operand 0, single buffered']
    #allocation10 [shape = 'u8[2048]{0}', space=vmem, size = 0x800, scoped, tag = 'output window, operand 1, single buffered']
    #allocation11 [shape = 's32[1]{0}', space=sflag, size = 0x4, scoped, tag = 'scoped memory for tpu_custom_call.1']
    %10 = vsyncpa [#allocation4], 0
    %11 = vsyncpa [#allocation7], 0
    %12 = vsyncpa [#allocation5], 0
    %13 = vsyncpa [#allocation11], 0
    // Predicated region
    $region2: #{tpu_custom_call.1} parent=1 // pred_check
      _
    $region3: #{tpu_custom_call.1} parent=1 // pred_check_branch
      %15 = sbr.rel (0) target = $region5
    $region4: #{tpu_custom_call.1} parent=1 // pred_region
      %s17 = ssub.s32 256, 256
      %18 = vsyncadd [#allocation4], %s17
      %s19 = sshll.u32 [#allocation3], 4
      %s20 = int_to_ptr.vmem [resolvable:$true] %s19
      %25 = dma.hbm_to_vmem [thread:$0]  %s0, 256, %s20, [#allocation4], 128, 128, 8
    $region5: #{tpu_custom_call.1} parent=1 // pred_fallthru
      _
    // Predicated region
    $region6: #{tpu_custom_call.1} parent=1 // pred_check
      _
    $region7: #{tpu_custom_call.1} parent=1 // pred_check_branch
      %27 = sbr.rel (0) target = $region9
    $region8: #{tpu_custom_call.1} parent=1 // pred_region
      %s29 = ssub.s32 256, 256
      %30 = vsyncadd [#allocation7], %s29
      %s31 = sshll.u32 [#allocation6], 4
      %s32 = int_to_ptr.vmem [resolvable:$true] %s31
      %37 = dma.hbm_to_vmem [thread:$0]  %s1, 256, %s32, [#allocation7], 128, 128, 8
    $region9: #{tpu_custom_call.1} parent=1 // pred_fallthru
      _
    // Predicated region
    $region10: #{tpu_custom_call.1} parent=1 // pred_check
      _
    $region11: #{tpu_custom_call.1} parent=1 // pred_check_branch
      %39 = sbr.rel (0) target = $region13
    $region12: #{tpu_custom_call.1} parent=1 // pred_region
      %s41 = ssub.s32 12288, 12288
      %42 = vsyncadd [#allocation7], %s41
      %s43 = sshll.u32 [#allocation8], 4
      %s44 = int_to_ptr.vmem [resolvable:$true] %s43
      %49 = dma.hbm_to_vmem [thread:$0]  %s2, 12288, %s44, [#allocation7], 256, 256, 16
    $region13: #{tpu_custom_call.1} parent=1 // pred_fallthru
      _
    // Predicated region
    $region14: #{tpu_custom_call.1} parent=1 // pred_check
      _
    $region15: #{tpu_custom_call.1} parent=1 // pred_check_branch
      %51 = sbr.rel (0) target = $region17
    $region16: #{tpu_custom_call.1} parent=1 // pred_region
      %52 = dma.done [#allocation4], 256
    $region17: #{tpu_custom_call.1} parent=1 // pred_fallthru
      _
    // Predicated region
    $region18: #{tpu_custom_call.1} parent=1 // pred_check
      _
    $region19: #{tpu_custom_call.1} parent=1 // pred_check_branch
      %54 = sbr.rel (0) target = $region21
    $region20: #{tpu_custom_call.1} parent=1 // pred_region
      %55 = dma.done [#allocation7], 256
    $region21: #{tpu_custom_call.1} parent=1 // pred_fallthru
      _
    // Predicated region
    $region22: #{tpu_custom_call.1} parent=1 // pred_check
      _
    $region23: #{tpu_custom_call.1} parent=1 // pred_check_branch
      %57 = sbr.rel (0) target = $region25
    $region24: #{tpu_custom_call.1} parent=1 // pred_region
      %58 = dma.done [#allocation7], 12288
    $region25: #{tpu_custom_call.1} parent=1 // pred_fallthru
      _
    %59 = vst [vmem:[#allocation2] sm:$0x1] 0.0
    %60 = vst [vmem:[#allocation2 + $0x10] sm:$0x1] 0.0
    %61 = vst [vmem:[#allocation2 + $0x9] sm:$0x1] 0.0
    %62 = vst [vmem:[#allocation2 + $0x19] sm:$0x1] 0.0
    %v63 = vld [vmem:[#allocation3] sm:$0xff]
    %v64 = vld [vmem:[#allocation3 + $0x8] sm:$0xff]
    %v65 = vmax.f32 %v63, 0.0
    %v66 = vmax.f32 %v64, 0.0
    %vm67 = vcmask 523264
    %68 = vst.msk [vmem:[#allocation2 + $0x1] sm:$0xff] %vm67, %v65
    %69 = vst.msk [vmem:[#allocation2 + $0x11] sm:$0xff] %vm67, %v66
    %v70 = vld [vmem:[#allocation6] sm:$0xff]
    %v71 = vld [vmem:[#allocation6 + $0x8] sm:$0xff]
    %v72 = vmax.f32 %v70, 0.0
    %v73 = vmax.f32 %v71, 0.0
    %76 = vrot.lane.b32.xlu0 %v72, 64
    %v77 = vpop.permute.xlu0 %76
    %78 = vrot.lane.b32.xlu0 %v73, 64
    %v79 = vpop.permute.xlu0 %78
    %vm82 = vcmask 1048064
    %83 = vst.msk [vmem:[#allocation2 + $0x1] sm:$0xff] %vm82, %v77
    %84 = vst.msk [vmem:[#allocation2 + $0x11] sm:$0xff] %vm82, %v79
    %v85 = vld [vmem:[#allocation2] sm:$0xff]
    %v86 = vld [vmem:[#allocation2 + $0x10] sm:$0xff]
    %v87 = vld [vmem:[#allocation8] sm:$0xff]
    %v88 = vld [vmem:[#allocation8 + $0x8] sm:$0xff]
    %v89 = vld [vmem:[#allocation8 + $0x10] sm:$0xff]
    %v90 = vld [vmem:[#allocation8 + $0x18] sm:$0xff]
    %v91 = vld [vmem:[#allocation8 + $0x20] sm:$0xff]
    %v92 = vld [vmem:[#allocation8 + $0x28] sm:$0xff]
    %v93 = vld [vmem:[#allocation8 + $0x30] sm:$0xff]
    %v94 = vld [vmem:[#allocation8 + $0x38] sm:$0xff]
    %v95 = vld [vmem:[#allocation8 + $0x40] sm:$0xff]
    %v96 = vld [vmem:[#allocation8 + $0x48] sm:$0xff]
    %v97 = vld [vmem:[#allocation8 + $0x50] sm:$0xff]
    %v98 = vld [vmem:[#allocation8 + $0x58] sm:$0xff]
    %v99 = vld [vmem:[#allocation8 + $0x60] sm:$0xff]
    %v100 = vld [vmem:[#allocation8 + $0x68] sm:$0xff]
    %v101 = vld [vmem:[#allocation8 + $0x70] sm:$0xff]
    %v102 = vld [vmem:[#allocation8 + $0x78] sm:$0xff]
    %v103 = vld [vmem:[#allocation8 + $0x80] sm:$0xff]
    %v104 = vld [vmem:[#allocation8 + $0x88] sm:$0xff]
    %v105 = vld [vmem:[#allocation8 + $0x90] sm:$0xff]
    %v106 = vld [vmem:[#allocation8 + $0x98] sm:$0xff]
    %v107 = vld [vmem:[#allocation8 + $0xa0] sm:$0xff]
    %v108 = vld [vmem:[#allocation8 + $0xa8] sm:$0xff]
    %v109 = vld [vmem:[#allocation8 + $0xb0] sm:$0xff]
    %v110 = vld [vmem:[#allocation8 + $0xb8] sm:$0xff]
    %v111 = vld [vmem:[#allocation8 + $0xc0] sm:$0xff]
    %v112 = vld [vmem:[#allocation8 + $0xc8] sm:$0xff]
    %v113 = vld [vmem:[#allocation8 + $0xd0] sm:$0xff]
    %v114 = vld [vmem:[#allocation8 + $0xd8] sm:$0xff]
    %v115 = vld [vmem:[#allocation8 + $0xe0] sm:$0xff]
    %v116 = vld [vmem:[#allocation8 + $0xe8] sm:$0xff]
    %v117 = vld [vmem:[#allocation8 + $0xf0] sm:$0xff]
    %v118 = vld [vmem:[#allocation8 + $0xf8] sm:$0xff]
    %v119 = vld [vmem:[#allocation2 + $0x1] sm:$0xff]
    %v120 = vld [vmem:[#allocation2 + $0x11] sm:$0xff]
    %s121 = scalar_lea.vmem [#allocation8], 256
    %v122 = vld [vmem:[%s121] sm:$0xff]
    %v123 = vld [vmem:[%s121 + $0x8] sm:$0xff]
    %v124 = vld [vmem:[%s121 + $0x10] sm:$0xff]
    %v125 = vld [vmem:[%s121 + $0x18] sm:$0xff]
    %v126 = vld [vmem:[%s121 + $0x20] sm:$0xff]
    %v127 = vld [vmem:[%s121 + $0x28] sm:$0xff]
    %v128 = vld [vmem:[%s121 + $0x30] sm:$0xff]
    %v129 = vld [vmem:[%s121 + $0x38] sm:$0xff]
    %v130 = vld [vmem:[%s121 + $0x40] sm:$0xff]
    %v131 = vld [vmem:[%s121 + $0x48] sm:$0xff]
    %v132 = vld [vmem:[%s121 + $0x50] sm:$0xff]
    %v133 = vld [vmem:[%s121 + $0x58] sm:$0xff]
    %v134 = vld [vmem:[%s121 + $0x60] sm:$0xff]
    %v135 = vld [vmem:[%s121 + $0x68] sm:$0xff]
    %v136 = vld [vmem:[%s121 + $0x70] sm:$0xff]
    %v137 = vld [vmem:[%s121 + $0x78] sm:$0xff]
    %v138 = vld [vmem:[%s121 + $0x80] sm:$0xff]
    %v139 = vld [vmem:[%s121 + $0x88] sm:$0xff]
    %v140 = vld [vmem:[%s121 + $0x90] sm:$0xff]
    %v141 = vld [vmem:[%s121 + $0x98] sm:$0xff]
    %v142 = vld [vmem:[%s121 + $0xa0] sm:$0xff]
    %v143 = vld [vmem:[%s121 + $0xa8] sm:$0xff]
    %v144 = vld [vmem:[%s121 + $0xb0] sm:$0xff]
    %v145 = vld [vmem:[%s121 + $0xb8] sm:$0xff]
    %v146 = vld [vmem:[%s121 + $0xc0] sm:$0xff]
    %v147 = vld [vmem:[%s121 + $0xc8] sm:$0xff]
    %v148 = vld [vmem:[%s121 + $0xd0] sm:$0xff]
    %v149 = vld [vmem:[%s121 + $0xd8] sm:$0xff]
    %v150 = vld [vmem:[%s121 + $0xe0] sm:$0xff]
    %v151 = vld [vmem:[%s121 + $0xe8] sm:$0xff]
    %v152 = vld [vmem:[%s121 + $0xf0] sm:$0xff]
    %v153 = vld [vmem:[%s121 + $0xf8] sm:$0xff]
    %154 = vmatprep.subr.mxu0 %v153
    %155 = vmatpush1.msra.mxu0 %v152
    %156 = vmatprep.subr.mxu0 %v151
    %157 = vmatpush1.msra.mxu0 %v150
    %158 = vmatprep.subr.mxu0 %v149
    %159 = vmatpush1.msra.mxu0 %v148
    %160 = vmatprep.subr.mxu0 %v147
    %161 = vmatpush1.msra.mxu0 %v146
    %162 = vmatprep.subr.mxu0 %v145
    %163 = vmatpush1.msra.mxu0 %v144
    %164 = vmatprep.subr.mxu0 %v143
    %165 = vmatpush1.msra.mxu0 %v142
    %166 = vmatprep.subr.mxu0 %v141
    %167 = vmatpush1.msra.mxu0 %v140
    %168 = vmatprep.subr.mxu0 %v139
    %169 = vmatpush1.msra.mxu0 %v138
    %170 = vmatprep.subr.mxu0 %v137
    %171 = vmatpush1.msra.mxu0 %v136
    %172 = vmatprep.subr.mxu0 %v135
    %173 = vmatpush1.msra.mxu0 %v134
    %174 = vmatprep.subr.mxu0 %v133
    %175 = vmatpush1.msra.mxu0 %v132
    %176 = vmatprep.subr.mxu0 %v131
    %177 = vmatpush1.msra.mxu0 %v130
    %178 = vmatprep.subr.mxu0 %v129
    %179 = vmatpush1.msra.mxu0 %v128
    %180 = vmatprep.subr.mxu0 %v127
    %181 = vmatpush1.msra.mxu0 %v126
    %182 = vmatprep.subr.mxu0 %v125
    %183 = vmatpush1.msra.mxu0 %v124
    %184 = vmatprep.subr.mxu0 %v123
    %185 = vmatpush1.msra.mxu0 %v122
    %186 = vmatprep.subr.mxu0 0.0
    %187 = vmatpush2.msra.mxu0 0.0
    %188 = vmatprep.subr.mxu0 0.0
    %189 = vmatpush2.msra.mxu0 0.0
    %190 = vmatprep.subr.mxu0 0.0
    %191 = vmatpush2.msra.mxu0 0.0
    %192 = vmatprep.subr.mxu0 0.0
    %193 = vmatpush2.msra.mxu0 0.0
    %194 = vmatprep.subr.mxu0 0.0
    %195 = vmatpush2.msra.mxu0 0.0
    %196 = vmatprep.subr.mxu0 0.0
    %197 = vmatpush2.msra.mxu0 0.0
    %198 = vmatprep.subr.mxu0 0.0
    %199 = vmatpush2.msra.mxu0 0.0
    %200 = vmatprep.subr.mxu0 0.0
    %201 = vmatpush2.msra.mxu0 0.0
    %202 = vmatprep.subr.mxu0 0.0
    %203 = vmatpush2.msra.mxu0 0.0
    %204 = vmatprep.subr.mxu0 0.0
    %205 = vmatpush2.msra.mxu0 0.0
    %206 = vmatprep.subr.mxu0 0.0
    %207 = vmatpush2.msra.mxu0 0.0
    %208 = vmatprep.subr.mxu0 0.0
    %209 = vmatpush2.msra.mxu0 0.0
    %210 = vmatprep.subr.mxu0 0.0
    %211 = vmatpush2.msra.mxu0 0.0
    %212 = vmatprep.subr.mxu0 0.0
    %213 = vmatpush2.msra.mxu0 0.0
    %214 = vmatprep.subr.mxu0 0.0
    %215 = vmatpush2.msra.mxu0 0.0
    %216 = vmatprep.subr.mxu0 0.0
    %217 = vmatpush2.msra.mxu0 0.0
    %218 = vmatprep.mubr.f32.mxu0 0.0
    %219 = vmatmul.mubr.f32.gmra.mxu0 %v119
    %v220 = vpop.f32.mrf.mxu0
    %v221 = vadd.f32 0.0, %v220
    %v222 = vpop.f32.mrf.mxu0
    %v223 = vadd.f32 0.0, %v222
    %224 = vmatprep.mubr.f32.mxu0 0.0
    %225 = vmatmul.mubr.f32.gmra.mxu0 %v120
    %v226 = vpop.f32.mrf.mxu0
    %v227 = vadd.f32 0.0, %v226
    %v228 = vpop.f32.mrf.mxu0
    %v229 = vadd.f32 0.0, %v228
    %230 = vdwg.mxu0
    %231 = vmatprep.subr.mxu0 %v118
    %232 = vmatpush1.msra.mxu0 %v117
    %233 = vmatprep.subr.mxu0 %v116
    %234 = vmatpush1.msra.mxu0 %v115
    %235 = vmatprep.subr.mxu0 %v114
    %236 = vmatpush1.msra.mxu0 %v113
    %237 = vmatprep.subr.mxu0 %v112
    %238 = vmatpush1.msra.mxu0 %v111
    %239 = vmatprep.subr.mxu0 %v110
    %240 = vmatpush1.msra.mxu0 %v109
    %241 = vmatprep.subr.mxu0 %v108
    %242 = vmatpush1.msra.mxu0 %v107
    %243 = vmatprep.subr.mxu0 %v106
    %244 = vmatpush1.msra.mxu0 %v105
    %245 = vmatprep.subr.mxu0 %v104
    %246 = vmatpush1.msra.mxu0 %v103
    %247 = vmatprep.subr.mxu0 %v102
    %248 = vmatpush1.msra.mxu0 %v101
    %249 = vmatprep.subr.mxu0 %v100
    %250 = vmatpush1.msra.mxu0 %v99
    %251 = vmatprep.subr.mxu0 %v98
    %252 = vmatpush1.msra.mxu0 %v97
    %253 = vmatprep.subr.mxu0 %v96
    %254 = vmatpush1.msra.mxu0 %v95
    %255 = vmatprep.subr.mxu0 %v94
    %256 = vmatpush1.msra.mxu0 %v93
    %257 = vmatprep.subr.mxu0 %v92
    %258 = vmatpush1.msra.mxu0 %v91
    %259 = vmatprep.subr.mxu0 %v90
    %260 = vmatpush1.msra.mxu0 %v89
    %261 = vmatprep.subr.mxu0 %v88
    %262 = vmatpush1.msra.mxu0 %v87
    %263 = vmatprep.subr.mxu0 0.0
    %264 = vmatpush2.msra.mxu0 0.0
    %265 = vmatprep.subr.mxu0 0.0
    %266 = vmatpush2.msra.mxu0 0.0
    %267 = vmatprep.subr.mxu0 0.0
    %268 = vmatpush2.msra.mxu0 0.0
    %269 = vmatprep.subr.mxu0 0.0
    %270 = vmatpush2.msra.mxu0 0.0
    %271 = vmatprep.subr.mxu0 0.0
    %272 = vmatpush2.msra.mxu0 0.0
    %273 = vmatprep.subr.mxu0 0.0
    %274 = vmatpush2.msra.mxu0 0.0
    %275 = vmatprep.subr.mxu0 0.0
    %276 = vmatpush2.msra.mxu0 0.0
    %277 = vmatprep.subr.mxu0 0.0
    %278 = vmatpush2.msra.mxu0 0.0
    %279 = vmatprep.subr.mxu0 0.0
    %280 = vmatpush2.msra.mxu0 0.0
    %281 = vmatprep.subr.mxu0 0.0
    %282 = vmatpush2.msra.mxu0 0.0
    %283 = vmatprep.subr.mxu0 0.0
    %284 = vmatpush2.msra.mxu0 0.0
    %285 = vmatprep.subr.mxu0 0.0
    %286 = vmatpush2.msra.mxu0 0.0
    %287 = vmatprep.subr.mxu0 0.0
    %288 = vmatpush2.msra.mxu0 0.0
    %289 = vmatprep.subr.mxu0 0.0
    %290 = vmatpush2.msra.mxu0 0.0
    %291 = vmatprep.subr.mxu0 0.0
    %292 = vmatpush2.msra.mxu0 0.0
    %293 = vmatprep.subr.mxu0 0.0
    %294 = vmatpush2.msra.mxu0 0.0
    %295 = vmatprep.mubr.f32.mxu0 0.0
    %296 = vmatmul.mubr.f32.gmra.mxu0 %v85
    %v297 = vpop.f32.mrf.mxu0
    %v298 = vadd.f32 %v221, %v297
    %v299 = vpop.f32.mrf.mxu0
    %v300 = vadd.f32 %v223, %v299
    %301 = vmatprep.mubr.f32.mxu0 0.0
    %302 = vmatmul.mubr.f32.gmra.mxu0 %v86
    %v303 = vpop.f32.mrf.mxu0
    %v304 = vadd.f32 %v227, %v303
    %v305 = vpop.f32.mrf.mxu0
    %v306 = vadd.f32 %v229, %v305
    %307 = vdwg.mxu0
    %v308 = vld [vmem:[#allocation2 + $0x2] sm:$0xff]
    %v309 = vld [vmem:[#allocation2 + $0x12] sm:$0xff]
    %s310 = scalar_lea.vmem [#allocation8], 512
    %v311 = vld [vmem:[%s310] sm:$0xff]
    %v312 = vld [vmem:[%s310 + $0x8] sm:$0xff]
    %v313 = vld [vmem:[%s310 + $0x10] sm:$0xff]
    %v314 = vld [vmem:[%s310 + $0x18] sm:$0xff]
    %v315 = vld [vmem:[%s310 + $0x20] sm:$0xff]
    %v316 = vld [vmem:[%s310 + $0x28] sm:$0xff]
    %v317 = vld [vmem:[%s310 + $0x30] sm:$0xff]
    %v318 = vld [vmem:[%s310 + $0x38] sm:$0xff]
    %v319 = vld [vmem:[%s310 + $0x40] sm:$0xff]
    %v320 = vld [vmem:[%s310 + $0x48] sm:$0xff]
    %v321 = vld [vmem:[%s310 + $0x50] sm:$0xff]
    %v322 = vld [vmem:[%s310 + $0x58] sm:$0xff]
    %v323 = vld [vmem:[%s310 + $0x60] sm:$0xff]
    %v324 = vld [vmem:[%s310 + $0x68] sm:$0xff]
    %v325 = vld [vmem:[%s310 + $0x70] sm:$0xff]
    %v326 = vld [vmem:[%s310 + $0x78] sm:$0xff]
    %v327 = vld [vmem:[%s310 + $0x80] sm:$0xff]
    %v328 = vld [vmem:[%s310 + $0x88] sm:$0xff]
    %v329 = vld [vmem:[%s310 + $0x90] sm:$0xff]
    %v330 = vld [vmem:[%s310 + $0x98] sm:$0xff]
    %v331 = vld [vmem:[%s310 + $0xa0] sm:$0xff]
    %v332 = vld [vmem:[%s310 + $0xa8] sm:$0xff]
    %v333 = vld [vmem:[%s310 + $0xb0] sm:$0xff]
    %v334 = vld [vmem:[%s310 + $0xb8] sm:$0xff]
    %v335 = vld [vmem:[%s310 + $0xc0] sm:$0xff]
    %v336 = vld [vmem:[%s310 + $0xc8] sm:$0xff]
    %v337 = vld [vmem:[%s310 + $0xd0] sm:$0xff]
    %v338 = vld [vmem:[%s310 + $0xd8] sm:$0xff]
    %v339 = vld [vmem:[%s310 + $0xe0] sm:$0xff]
    %v340 = vld [vmem:[%s310 + $0xe8] sm:$0xff]
    %v341 = vld [vmem:[%s310 + $0xf0] sm:$0xff]
    %v342 = vld [vmem:[%s310 + $0xf8] sm:$0xff]
    %343 = vmatprep.subr.mxu0 %v342
    %344 = vmatpush1.msra.mxu0 %v341
    %345 = vmatprep.subr.mxu0 %v340
    %346 = vmatpush1.msra.mxu0 %v339
    %347 = vmatprep.subr.mxu0 %v338
    %348 = vmatpush1.msra.mxu0 %v337
    %349 = vmatprep.subr.mxu0 %v336
    %350 = vmatpush1.msra.mxu0 %v335
    %351 = vmatprep.subr.mxu0 %v334
    %352 = vmatpush1.msra.mxu0 %v333
    %353 = vmatprep.subr.mxu0 %v332
    %354 = vmatpush1.msra.mxu0 %v331
    %355 = vmatprep.subr.mxu0 %v330
    %356 = vmatpush1.msra.mxu0 %v329
    %357 = vmatprep.subr.mxu0 %v328
    %358 = vmatpush1.msra.mxu0 %v327
    %359 = vmatprep.subr.mxu0 %v326
    %360 = vmatpush1.msra.mxu0 %v325
    %361 = vmatprep.subr.mxu0 %v324
    %362 = vmatpush1.msra.mxu0 %v323
    %363 = vmatprep.subr.mxu0 %v322
    %364 = vmatpush1.msra.mxu0 %v321
    %365 = vmatprep.subr.mxu0 %v320
    %366 = vmatpush1.msra.mxu0 %v319
    %367 = vmatprep.subr.mxu0 %v318
    %368 = vmatpush1.msra.mxu0 %v317
    %369 = vmatprep.subr.mxu0 %v316
    %370 = vmatpush1.msra.mxu0 %v315
    %371 = vmatprep.subr.mxu0 %v314
    %372 = vmatpush1.msra.mxu0 %v313
    %373 = vmatprep.subr.mxu0 %v312
    %374 = vmatpush1.msra.mxu0 %v311
    %375 = vmatprep.subr.mxu0 0.0
    %376 = vmatpush2.msra.mxu0 0.0
    %377 = vmatprep.subr.mxu0 0.0
    %378 = vmatpush2.msra.mxu0 0.0
    %379 = vmatprep.subr.mxu0 0.0
    %380 = vmatpush2.msra.mxu0 0.0
    %381 = vmatprep.subr.mxu0 0.0
    %382 = vmatpush2.msra.mxu0 0.0
    %383 = vmatprep.subr.mxu0 0.0
    %384 = vmatpush2.msra.mxu0 0.0
    %385 = vmatprep.subr.mxu0 0.0
    %386 = vmatpush2.msra.mxu0 0.0
    %387 = vmatprep.subr.mxu0 0.0
    %388 = vmatpush2.msra.mxu0 0.0
    %389 = vmatprep.subr.mxu0 0.0
    %390 = vmatpush2.msra.mxu0 0.0
    %391 = vmatprep.subr.mxu0 0.0
    %392 = vmatpush2.msra.mxu0 0.0
    %393 = vmatprep.subr.mxu0 0.0
    %394 = vmatpush2.msra.mxu0 0.0
    %395 = vmatprep.subr.mxu0 0.0
    %396 = vmatpush2.msra.mxu0 0.0
    %397 = vmatprep.subr.mxu0 0.0
    %398 = vmatpush2.msra.mxu0 0.0
    %399 = vmatprep.subr.mxu0 0.0
    %400 = vmatpush2.msra.mxu0 0.0
    %401 = vmatprep.subr.mxu0 0.0
    %402 = vmatpush2.msra.mxu0 0.0
    %403 = vmatprep.subr.mxu0 0.0
    %404 = vmatpush2.msra.mxu0 0.0
    %405 = vmatprep.subr.mxu0 0.0
    %406 = vmatpush2.msra.mxu0 0.0
    %407 = vmatprep.mubr.f32.mxu0 0.0
    %408 = vmatmul.mubr.f32.gmra.mxu0 %v308
    %v409 = vpop.f32.mrf.mxu0
    %v410 = vadd.f32 0.0, %v409
    %v411 = vpop.f32.mrf.mxu0
    %v412 = vadd.f32 0.0, %v411
    %413 = vmatprep.mubr.f32.mxu0 0.0
    %414 = vmatmul.mubr.f32.gmra.mxu0 %v309
    %v415 = vpop.f32.mrf.mxu0
    %v416 = vadd.f32 0.0, %v415
    %v417 = vpop.f32.mrf.mxu0
    %v418 = vadd.f32 0.0, %v417
    %419 = vdwg.mxu0
    %v420 = vadd.f32 %v298, %v410
    %v421 = vadd.f32 %v300, %v412
    %v422 = vadd.f32 %v304, %v416
    %v423 = vadd.f32 %v306, %v418
    %424 = vst [vmem:[#allocation9] sm:$0xff] %v420
    %425 = vst [vmem:[#allocation9 + $0x8] sm:$0xff] %v421
    %426 = vst [vmem:[#allocation9 + $0x10] sm:$0xff] %v422
    %427 = vst [vmem:[#allocation9 + $0x18] sm:$0xff] %v423
    %v428 = vadd.f32 %v420, %v422
    %v429 = vrot.slane %v428, 4
    %v430 = vadd.f32 %v428, %v429
    %v431 = vrot.slane %v430, 2
    %v432 = vadd.f32 %v430, %v431
    %v433 = vrot.slane %v432, 1
    %v434 = vadd.f32 %v432, %v433
    %v435 = vadd.f32 %v421, %v423
    %v436 = vrot.slane %v435, 4
    %v437 = vadd.f32 %v435, %v436
    %v438 = vrot.slane %v437, 2
    %v439 = vadd.f32 %v437, %v438
    %v440 = vrot.slane %v439, 1
    %v441 = vadd.f32 %v439, %v440
    %v442 = vrcp.pop 16.0
    %v443 = vmul.f32 %v434, %v442
    %v444 = vmul.f32 %v441, %v442
    %v445 = vsub.f32 %v420, %v443
    %v446 = vsub.f32 %v421, %v444
    %v447 = vsub.f32 %v422, %v443
    %v448 = vsub.f32 %v423, %v444
    %v449 = vmul.f32 %v445, %v445
    %v450 = vmul.f32 %v446, %v446
    %v451 = vmul.f32 %v447, %v447
    %v452 = vmul.f32 %v448, %v448
    %v453 = vadd.f32 %v449, %v451
    %v454 = vrot.slane %v453, 4
    %v455 = vadd.f32 %v453, %v454
    %v456 = vrot.slane %v455, 2
    %v457 = vadd.f32 %v455, %v456
    %v458 = vrot.slane %v457, 1
    %v459 = vadd.f32 %v457, %v458
    %v460 = vadd.f32 %v450, %v452
    %v461 = vrot.slane %v460, 4
    %v462 = vadd.f32 %v460, %v461
    %v463 = vrot.slane %v462, 2
    %v464 = vadd.f32 %v462, %v463
    %v465 = vrot.slane %v464, 1
    %v466 = vadd.f32 %v464, %v465
    %vm467 = vcmask 1040384
    %v468 = vsel %vm467, %v434, %v459
    %v469 = vsel %vm467, %v441, %v466
    %v472 = vcombine.low %v468, %v469
    %v474 = vunpack.c.l.s4 1983009808
    %v475 = vunpack.c.0.s8 %v474
    %v476 = vlaneseq
    %v477 = vshrl.u32 %v476, 7
    %v478 = vsub.s32 %v475, %v477
    %v479 = vrot.slane %v472, %v478
    %481 = vst [vmem:[#allocation10] sm:$0xf] %v479
    // Predicated region
    $region26: #{tpu_custom_call.1} parent=1 // pred_check
      _
    $region27: #{tpu_custom_call.1} parent=1 // pred_check_branch
      %483 = sbr.rel (0) target = $region29
    $region28: #{tpu_custom_call.1} parent=1 // pred_region
      %s485 = ssub.s32 512, 512
      %486 = vsyncadd [#allocation5], %s485
      %s487 = sshll.u32 [#allocation9], 4
      %s488 = int_to_ptr.vmem [resolvable:$true] %s487
      %493 = dma.vmem_to_hbm [thread:$0]  %s488, 512, %s3, [#allocation5], 256, 256, 16
    $region29: #{tpu_custom_call.1} parent=1 // pred_fallthru
      _
    // Predicated region
    $region30: #{tpu_custom_call.1} parent=1 // pred_check
      _
    $region31: #{tpu_custom_call.1} parent=1 // pred_check_branch
      %495 = sbr.rel (0) target = $region33
    $region32: #{tpu_custom_call.1} parent=1 // pred_region
      %s497 = ssub.s32 64, 64
      %498 = vsyncadd [#allocation11], %s497
      %s500 = sshll.u32 [#allocation10], 4
      %s501 = int_to_ptr.vmem [resolvable:$true] %s500
      %503 = dma.vmem_to_hbm [thread:$0]  %s501, 64, %s4, [#allocation11]
    $region33: #{tpu_custom_call.1} parent=1 // pred_fallthru
      _
    // Predicated region
    $region34: #{tpu_custom_call.1} parent=1 // pred_check
      _
    $region35: #{tpu_custom_call.1} parent=1 // pred_check_branch
      %505 = sbr.rel (0) target = $region37
    $region36: #{tpu_custom_call.1} parent=1 // pred_region
      %506 = dma.done [#allocation5], 512
    $region37: #{tpu_custom_call.1} parent=1 // pred_fallthru
      _
    // Predicated region
    $region38: #{tpu_custom_call.1} parent=1 // pred_check
      _
    $region39: #{tpu_custom_call.1} parent=1 // pred_check_branch
      %508 = sbr.rel (0) target = $region41
    $region40: #{tpu_custom_call.1} parent=1 // pred_region
      %509 = dma.done [#allocation11], 64
    $region41: #{tpu_custom_call.1} parent=1 // pred_fallthru
      _
    %510 = vsyncpa [#allocation4], 1
    %511 = vsyncpa [#allocation7], 1
    %512 = vsyncpa [#allocation5], 1
    %513 = vsyncpa [#allocation11], 1

</llo_original>
